<compile_context>
chip_gen: v7x
topology: tpu7x:2x2x1
jax: 0.10.0
libtpu: 0.0.40
codegen_flags: <defaults>
</compile_context>

<pallas_src>
import numpy as np
import jax
import jax.numpy as jnp
from jax import lax
from jax.experimental import pallas as pl
from jax.experimental.pallas import tpu as pltpu

MEAN = np.array([0.48145466, 0.4578275, 0.40821073], dtype=np.float32)
STD = np.array([0.26862954, 0.26130258, 0.27577711], dtype=np.float32)
# Per-channel value of the normalized all-ones trigger, computed in float32
# exactly like the reference: (1 - mean_c) / std_c.  All values are > 0.
PATTERN_C = tuple(float(v) for v in (np.float32(1.0) - MEAN) / STD)


# ----------------------------- kernels ------------------------------------- #

def _blend_kernel(pat_ref, x_ref, o_ref):
    # pat_ref: (1, C*H*W) f32 -- pattern value inside the trigger patch,
    #          exactly 0.0 outside (fetched once; constant block index).
    # x_ref / o_ref: (tb, C*H*W) in x's native dtype.
    pat = pat_ref[...]
    o_ref[...] = jnp.where(pat != 0.0, pat.astype(x_ref.dtype), x_ref[...])


def _patch_kernel(x_ref, o_ref, *, yp, sp, W, pattern):
    # x_ref / o_ref: (R, sp*W) -- only the sp trigger rows of each
    # (image, channel) row; channel = global_row % 3 = local_row % 3 because
    # every block starts at a row index that is a multiple of 3.
    w = lax.broadcasted_iota(jnp.int32, x_ref.shape, 1) % W
    c = lax.broadcasted_iota(jnp.int32, x_ref.shape, 0) % 3
    in_cols = (w >= yp) & (w < yp + sp)
    pat = jnp.where(c == 0, pattern[0],
                    jnp.where(c == 1, pattern[1], pattern[2])).astype(x_ref.dtype)
    o_ref[...] = jnp.where(in_cols, pat, x_ref[...])


# ----------------------------- block sizing -------------------------------- #

def _pick_batch_block(batch, bytes_per_item, target_bytes=6 << 20, min_blocks=2):
    """Batch block: ~target_bytes per buffer, multiple of 8 (or the full batch),
    and at least `min_blocks` grid steps when the batch allows it (so v7x's two
    TensorCores both get work).  No divisor-of-B requirement."""
    cap = max(1, int(target_bytes) // max(1, int(bytes_per_item)))
    if cap >= batch:
        tb = batch                          # full dim: any size is legal
    else:
        tb = max(8, (cap // 8) * 8)         # sublane-tiled block
    if batch >= min_blocks * 8:
        split = (batch // min_blocks) // 8 * 8
        if split >= 8:
            tb = min(tb, split)
    if tb != batch and tb % 8 != 0:         # safety: 8-multiple or full dim
        tb = batch
    return max(1, min(tb, batch))


def _pick_row_block(rows, bytes_per_row, target_bytes=4 << 20, min_blocks=2):
    """Row block for the donated path: multiple of 24 (= lcm of 8-sublane tiling
    and 3 channels) or the full dim, with >= min_blocks steps when possible."""
    if rows <= 24:
        return rows
    cap = max(24, (max(1, int(target_bytes) // max(1, int(bytes_per_row))) // 24) * 24)
    tr = min(cap, (rows // 24) * 24)
    if rows >= min_blocks * 24:
        split = (rows // min_blocks) // 24 * 24
        if split >= 24:
            tr = min(tr, split)
    return max(24, tr)


# ----------------------------- wrappers ------------------------------------ #

def trigger_badnet_forward(x, image_size, xp=0, yp=0, sp=16):
    """BadNet trigger blend: out = x*(1-mask) + pattern*mask (NCHW)."""
    B, C, H, W = x.shape
    assert C == 3 and H == image_size and W == image_size
    HW = H * W
    N = C * HW

    # Tiny constant input: pre-masked pattern row (pattern inside the patch,
    # exact 0 outside).  12*HW bytes, fetched once (constant block index).
    h_in = (jnp.arange(H) >= xp) & (jnp.arange(H) < xp + sp)
    w_in = (jnp.arange(W) >= yp) & (jnp.arange(W) < yp + sp)
    m = (h_in[:, None] & w_in[None, :]).astype(jnp.float32)            # (H, W)
    pat_row = (jnp.asarray(PATTERN_C, jnp.float32)[:, None, None] * m).reshape(1, N)

    x2 = x.reshape(B, N)                      # free reshape; lane axis = C*H*W
    tb = _pick_batch_block(B, N * x.dtype.itemsize)

    out2 = pl.pallas_call(
        _blend_kernel,
        out_shape=jax.ShapeDtypeStruct((B, N), x.dtype),
        grid=(pl.cdiv(B, tb),),               # ragged last block is fine
        in_specs=[
            pl.BlockSpec((1, N), lambda b: (0, 0)),      # constant block
            pl.BlockSpec((tb, N), lambda b: (b, 0)),
        ],
        out_specs=pl.BlockSpec((tb, N), lambda b: (b, 0)),
        compiler_params=pltpu.CompilerParams(
            dimension_semantics=("parallel",),
            vmem_limit_bytes=48 << 20),
    )(pat_row, x2)
    return out2.reshape(B, C, H, W)


def trigger_badnet_forward_donated(x, image_size, xp=0, yp=0, sp=16):
    """Same result; aliases x to the output and only rewrites the sp trigger
    rows of each image (lane-dense (R, sp*W) blocks).  When the caller donates
    x this touches ~H/sp x less HBM; if x stays live, XLA copies (still correct).
    Falls back to the blend path for trigger geometries it cannot express."""
    B, C, H, W = x.shape
    assert C == 3 and H == image_size and W == image_size
    ok = (sp > 0 and xp >= 0 and yp >= 0 and xp % sp == 0
          and xp + sp <= H and yp + sp <= W and (sp * W) % 128 == 0)
    if not ok:
        return trigger_badnet_forward(x, image_size, xp=xp, yp=yp, sp=sp)

    rows, HW, L = B * C, H * W, sp * W
    x2 = x.reshape(rows, HW)                  # free reshape
    tr = _pick_row_block(rows, L * x.dtype.itemsize)
    lane_blk = xp // sp                       # lane-block index of trigger rows

    import functools
    kernel = functools.partial(_patch_kernel, yp=yp, sp=sp, W=W, pattern=PATTERN_C)

    out2 = pl.pallas_call(
        kernel,
        out_shape=jax.ShapeDtypeStruct((rows, HW), x.dtype),
        grid=(pl.cdiv(rows, tr),),
        in_specs=[pl.BlockSpec((tr, L), lambda r: (r, lane_blk))],
        out_specs=pl.BlockSpec((tr, L), lambda r: (r, lane_blk)),
        input_output_aliases={0: 0},
        compiler_params=pltpu.CompilerParams(
            dimension_semantics=("parallel",)),
    )(x2)
    return out2.reshape(B, C, H, W)


# ----------------------------- reference / test ----------------------------- #

def _reference(x, image_size, xp=0, yp=0, sp=16):
    mean = jnp.asarray(MEAN)[:, None, None]
    std = jnp.asarray(STD)[:, None, None]
    pattern = (jnp.ones((3, image_size, image_size), jnp.float32) - mean) / std
    mask = jnp.zeros((3, image_size, image_size), jnp.float32)
    mask = mask.at[:, xp:xp + sp, yp:yp + sp].set(1.0)
    return x * (1.0 - mask) + pattern * mask


if __name__ == "__main__":
    IMG = 32  # sp=16 trigger covers the top-left quarter
    key = jax.random.PRNGKey(0)

    # Small case (single full-batch block).
    x = jax.random.normal(key, (2, 3, IMG, IMG), dtype=jnp.float32)
    ref = _reference(x, image_size=IMG)

    out = jax.block_until_ready(trigger_badnet_forward(x, image_size=IMG))
    assert out.shape == x.shape
    assert jnp.allclose(out, ref, atol=1e-6, rtol=1e-6)

    out_d = jax.block_until_ready(trigger_badnet_forward_donated(x, image_size=IMG))
    assert out_d.shape == x.shape
    assert jnp.allclose(out_d, ref, atol=1e-6, rtol=1e-6)

    # Awkward batch (17): exercises multi-step grid with a ragged last block.
    x17 = jax.random.normal(jax.random.PRNGKey(1), (17, 3, IMG, IMG), dtype=jnp.float32)
    ref17 = _reference(x17, image_size=IMG)
    out17 = jax.block_until_ready(trigger_badnet_forward(x17, image_size=IMG))
    assert jnp.allclose(out17, ref17, atol=1e-6, rtol=1e-6)

    print("KERNEL_OK")
</pallas_src>

<mosaic_0001>
module attributes {stable_mosaic.version = 11 : i64} {
  func.func @_blend_kernel(%arg0: i32, %arg1: memref<1x3072xf32, #tpu.memory_space<vmem>>, %arg2: memref<2x3072xf32, #tpu.memory_space<vmem>>, %arg3: memref<2x3072xf32, #tpu.memory_space<vmem>>) attributes {dimension_semantics = [#tpu.dimension_semantics<parallel>], iteration_bounds = array<i64: 1>, scalar_prefetch = 0 : i64, scratch_operands = 0 : i64, tpu.core_type = #tpu.core_type<tc>, window_params = [{pipeline_mode = #tpu.pipeline_mode<synchronous>, transform_indices = @transform_0, window_bounds = array<i64: 1, 3072>}, {transform_indices = @transform_1, window_bounds = array<i64: 2, 3072>}, {transform_indices = @transform_2, window_bounds = array<i64: 2, 3072>}]} {
    %c0 = arith.constant 0 : index
    %c0_0 = arith.constant 0 : index
    %0 = vector.load %arg1[%c0, %c0_0] : memref<1x3072xf32, #tpu.memory_space<vmem>>, vector<1x3072xf32>
    %cst = arith.constant 0.000000e+00 : f32
    %1 = vector.broadcast %cst : f32 to vector<1x3072xf32>
    %2 = arith.cmpf one, %0, %1 : vector<1x3072xf32>
    %c0_1 = arith.constant 0 : index
    %c0_2 = arith.constant 0 : index
    %3 = vector.load %arg2[%c0_1, %c0_2] : memref<2x3072xf32, #tpu.memory_space<vmem>>, vector<2x3072xf32>
    %4 = vector.shape_cast %2 : vector<1x3072xi1> to vector<1x3072xi1>
    %5 = vector.broadcast %4 : vector<1x3072xi1> to vector<2x3072xi1>
    %6 = vector.shape_cast %0 : vector<1x3072xf32> to vector<1x3072xf32>
    %7 = vector.broadcast %6 : vector<1x3072xf32> to vector<2x3072xf32>
    %8 = arith.select %5, %7, %3 : vector<2x3072xi1>, vector<2x3072xf32>
    %c0_3 = arith.constant 0 : index
    %c0_4 = arith.constant 0 : index
    %9 = vector.load %arg3[%c0_3, %c0_4] : memref<2x3072xf32, #tpu.memory_space<vmem>>, vector<2x3072xf32>
    tpu.vector_store %arg3[%c0_3, %c0_4], %8 {strides = array<i32>} : memref<2x3072xf32, #tpu.memory_space<vmem>>, vector<2x3072xf32>,
    return
  }
  func.func @transform_0(%arg0: i32) -> (i32, i32) {
    %c0_i32 = arith.constant 0 : i32
    %c0_i32_0 = arith.constant 0 : i32
    %c0_i32_1 = arith.constant 0 : i32
    return %c0_i32, %c0_i32_0 : i32, i32
  }
  func.func @transform_1(%arg0: i32) -> (i32, i32) {
    %c0_i32 = arith.constant 0 : i32
    %c0_i32_0 = arith.constant 0 : i32
    return %arg0, %c0_i32 : i32, i32
  }
  func.func @transform_2(%arg0: i32) -> (i32, i32) {
    %c0_i32 = arith.constant 0 : i32
    %c0_i32_0 = arith.constant 0 : i32
    return %arg0, %c0_i32 : i32, i32
  }
}

</mosaic_0001>

<llo_original>
// kernel: tpu_custom_call.1
$region0: #{tpu_custom_call.1}
  #allocation0 [shape = 'u32[]', space=smem, size = 0x4, offset = 0x4, fixed_abs, tag = 'smem constant byte address 0x4 - core index']
  #allocation1 [shape = 'u32[144,128]{1,0:T(1,128)}', space=vmem, size = 0x12000, scoped, tag = 'internal scratch']
  %s0 = inlined_call_operand.hbm [shape: f32[1,3072], index: 0, kind: input, shape index: {}]
  %s1 = inlined_call_operand.hbm [shape: f32[2,3072], index: 1, kind: input, shape index: {}]
  %s2 = inlined_call_operand.hbm [shape: f32[2,3072], index: 2, kind: output, shape index: {}]
  %s3 = sld [smem:[#allocation0]]
  $region26: #{tpu_custom_call.1} parent=0
    _
  %s5 = ssub.s32 1, %s3
  %s6 = scalar_select 0, %s5, %s3
  $region1: #{tpu_custom_call.1} parent=0
    #allocation2 [shape = 'u8[12288]{0}', space=vmem, size = 0x3000, scoped, tag = 'input window, operand 0, single buffered']
    #allocation3 [shape = 's32[1]{0}', space=sflag, size = 0x4, scoped, tag = 'scoped memory for tpu_custom_call.1']
    #allocation4 [shape = 's32[1]{0}', space=sflag, size = 0x4, scoped, tag = 'scoped memory for tpu_custom_call.1']
    #allocation5 [shape = 'u8[24576]{0}', space=vmem, size = 0x6000, scoped, tag = 'input window, operand 1, single buffered']
    #allocation6 [shape = 's32[1]{0}', space=sflag, size = 0x4, scoped, tag = 'scoped memory for tpu_custom_call.1']
    #allocation7 [shape = 'u8[24576]{0}', space=vmem, size = 0x6000, scoped, tag = 'output window, operand 0, single buffered']
    %7 = vsyncpa [#allocation3], 0
    %8 = vsyncpa [#allocation6], 0
    %9 = vsyncpa [#allocation4], 0
    // Predicated region
    $region2: #{tpu_custom_call.1} parent=1 // pred_check
      _
    $region3: #{tpu_custom_call.1} parent=1 // pred_check_branch
      %11 = sbr.rel (0) target = $region5
    $region4: #{tpu_custom_call.1} parent=1 // pred_region
      %s13 = ssub.s32 384, 384
      %14 = vsyncadd [#allocation3], %s13
      %s16 = sshll.u32 [#allocation2], 4
      %s17 = int_to_ptr.vmem [resolvable:$true] %s16
      %19 = dma.hbm_to_vmem [thread:$0]  %s0, 384, %s17, [#allocation3]
    $region5: #{tpu_custom_call.1} parent=1 // pred_fallthru
      _
    // Predicated region
    $region6: #{tpu_custom_call.1} parent=1 // pred_check
      _
    $region7: #{tpu_custom_call.1} parent=1 // pred_check_branch
      %21 = sbr.rel (0) target = $region9
    $region8: #{tpu_custom_call.1} parent=1 // pred_region
      %s23 = ssub.s32 768, 768
      %24 = vsyncadd [#allocation6], %s23
      %s26 = sshll.u32 [#allocation5], 4
      %s27 = int_to_ptr.vmem [resolvable:$true] %s26
      %29 = dma.hbm_to_vmem [thread:$0]  %s1, 768, %s27, [#allocation6]
    $region9: #{tpu_custom_call.1} parent=1 // pred_fallthru
      _
    // Predicated region
    $region10: #{tpu_custom_call.1} parent=1 // pred_check
      _
    $region11: #{tpu_custom_call.1} parent=1 // pred_check_branch
      %31 = sbr.rel (0) target = $region13
    $region12: #{tpu_custom_call.1} parent=1 // pred_region
      %32 = dma.done [#allocation3], 384
    $region13: #{tpu_custom_call.1} parent=1 // pred_fallthru
      _
    // Predicated region
    $region14: #{tpu_custom_call.1} parent=1 // pred_check
      _
    $region15: #{tpu_custom_call.1} parent=1 // pred_check_branch
      %34 = sbr.rel (0) target = $region17
    $region16: #{tpu_custom_call.1} parent=1 // pred_region
      %35 = dma.done [#allocation6], 768
    $region17: #{tpu_custom_call.1} parent=1 // pred_fallthru
      _
    %v36 = vld [vmem:[#allocation2] sm:$0xff]
    %v37 = vld [vmem:[#allocation2 + $0x8] sm:$0xff]
    %v38 = vld [vmem:[#allocation2 + $0x10] sm:$0xff]
    %vm39 = vcmp.ne.f32.partialorder %v36, 0.0
    %vm40 = vcmp.ne.f32.partialorder %v37, 0.0
    %vm41 = vcmp.ne.f32.partialorder %v38, 0.0
    %v42 = vld [vmem:[#allocation5] sm:$0xff]
    %v43 = vld [vmem:[#allocation5 + $0x8] sm:$0xff]
    %v44 = vld [vmem:[#allocation5 + $0x10] sm:$0xff]
    %v45 = vld [vmem:[#allocation5 + $0x18] sm:$0xff]
    %v46 = vld [vmem:[#allocation5 + $0x20] sm:$0xff]
    %v47 = vld [vmem:[#allocation5 + $0x28] sm:$0xff]
    %v48 = vsel %vm39, 1, 0
    %v49 = vsel %vm40, 1, 0
    %v50 = vsel %vm41, 1, 0
    %v51 = vlaneseq
    %v52 = vshrl.u32 %v51, 7
    %v53 = vsub.s32 0, %v52
    %v54 = vrot.slane %v48, %v53
    %v55 = vlaneseq
    %v56 = vshrl.u32 %v55, 7
    %v57 = vsub.s32 1, %v56
    %v58 = vrot.slane %v48, %v57
    %v59 = vlaneseq
    %v60 = vshrl.u32 %v59, 7
    %v61 = vsub.s32 2, %v60
    %v62 = vrot.slane %v48, %v61
    %v63 = vlaneseq
    %v64 = vshrl.u32 %v63, 7
    %v65 = vsub.s32 3, %v64
    %v66 = vrot.slane %v48, %v65
    %v67 = vlaneseq
    %v68 = vshrl.u32 %v67, 7
    %v69 = vsub.s32 4, %v68
    %v70 = vrot.slane %v48, %v69
    %v71 = vlaneseq
    %v72 = vshrl.u32 %v71, 7
    %v73 = vsub.s32 5, %v72
    %v74 = vrot.slane %v48, %v73
    %v75 = vlaneseq
    %v76 = vshrl.u32 %v75, 7
    %v77 = vsub.s32 6, %v76
    %v78 = vrot.slane %v48, %v77
    %v79 = vlaneseq
    %v80 = vshrl.u32 %v79, 7
    %v81 = vsub.s32 7, %v80
    %v82 = vrot.slane %v48, %v81
    %v83 = vlaneseq
    %v84 = vshrl.u32 %v83, 7
    %v85 = vsub.s32 0, %v84
    %v86 = vrot.slane %v49, %v85
    %v87 = vlaneseq
    %v88 = vshrl.u32 %v87, 7
    %v89 = vsub.s32 1, %v88
    %v90 = vrot.slane %v49, %v89
    %v91 = vlaneseq
    %v92 = vshrl.u32 %v91, 7
    %v93 = vsub.s32 2, %v92
    %v94 = vrot.slane %v49, %v93
    %v95 = vlaneseq
    %v96 = vshrl.u32 %v95, 7
    %v97 = vsub.s32 3, %v96
    %v98 = vrot.slane %v49, %v97
    %v99 = vlaneseq
    %v100 = vshrl.u32 %v99, 7
    %v101 = vsub.s32 4, %v100
    %v102 = vrot.slane %v49, %v101
    %v103 = vlaneseq
    %v104 = vshrl.u32 %v103, 7
    %v105 = vsub.s32 5, %v104
    %v106 = vrot.slane %v49, %v105
    %v107 = vlaneseq
    %v108 = vshrl.u32 %v107, 7
    %v109 = vsub.s32 6, %v108
    %v110 = vrot.slane %v49, %v109
    %v111 = vlaneseq
    %v112 = vshrl.u32 %v111, 7
    %v113 = vsub.s32 7, %v112
    %v114 = vrot.slane %v49, %v113
    %v115 = vlaneseq
    %v116 = vshrl.u32 %v115, 7
    %v117 = vsub.s32 0, %v116
    %v118 = vrot.slane %v50, %v117
    %v119 = vlaneseq
    %v120 = vshrl.u32 %v119, 7
    %v121 = vsub.s32 1, %v120
    %v122 = vrot.slane %v50, %v121
    %v123 = vlaneseq
    %v124 = vshrl.u32 %v123, 7
    %v125 = vsub.s32 2, %v124
    %v126 = vrot.slane %v50, %v125
    %v127 = vlaneseq
    %v128 = vshrl.u32 %v127, 7
    %v129 = vsub.s32 3, %v128
    %v130 = vrot.slane %v50, %v129
    %v131 = vlaneseq
    %v132 = vshrl.u32 %v131, 7
    %v133 = vsub.s32 4, %v132
    %v134 = vrot.slane %v50, %v133
    %v135 = vlaneseq
    %v136 = vshrl.u32 %v135, 7
    %v137 = vsub.s32 5, %v136
    %v138 = vrot.slane %v50, %v137
    %v139 = vlaneseq
    %v140 = vshrl.u32 %v139, 7
    %v141 = vsub.s32 6, %v140
    %v142 = vrot.slane %v50, %v141
    %v143 = vlaneseq
    %v144 = vshrl.u32 %v143, 7
    %v145 = vsub.s32 7, %v144
    %v146 = vrot.slane %v50, %v145
    %vm147 = vcmp.eq.s32.totalorder %v54, 1
    %vm148 = vcmp.eq.s32.totalorder %v58, 1
    %vm149 = vcmp.eq.s32.totalorder %v62, 1
    %vm150 = vcmp.eq.s32.totalorder %v66, 1
    %vm151 = vcmp.eq.s32.totalorder %v70, 1
    %vm152 = vcmp.eq.s32.totalorder %v74, 1
    %vm153 = vcmp.eq.s32.totalorder %v78, 1
    %vm154 = vcmp.eq.s32.totalorder %v82, 1
    %vm155 = vcmp.eq.s32.totalorder %v86, 1
    %vm156 = vcmp.eq.s32.totalorder %v90, 1
    %vm157 = vcmp.eq.s32.totalorder %v94, 1
    %vm158 = vcmp.eq.s32.totalorder %v98, 1
    %vm159 = vcmp.eq.s32.totalorder %v102, 1
    %vm160 = vcmp.eq.s32.totalorder %v106, 1
    %vm161 = vcmp.eq.s32.totalorder %v110, 1
    %vm162 = vcmp.eq.s32.totalorder %v114, 1
    %vm163 = vcmp.eq.s32.totalorder %v118, 1
    %vm164 = vcmp.eq.s32.totalorder %v122, 1
    %vm165 = vcmp.eq.s32.totalorder %v126, 1
    %vm166 = vcmp.eq.s32.totalorder %v130, 1
    %vm167 = vcmp.eq.s32.totalorder %v134, 1
    %vm168 = vcmp.eq.s32.totalorder %v138, 1
    %vm169 = vcmp.eq.s32.totalorder %v142, 1
    %vm170 = vcmp.eq.s32.totalorder %v146, 1
    %v174 = vlaneseq
    %v175 = vshrl.u32 %v174, 7
    %v176 = vsub.s32 0, %v175
    %v177 = vrot.slane %v36, %v176
    %v178 = vlaneseq
    %v179 = vshrl.u32 %v178, 7
    %v180 = vsub.s32 1, %v179
    %v181 = vrot.slane %v36, %v180
    %v182 = vlaneseq
    %v183 = vshrl.u32 %v182, 7
    %v184 = vsub.s32 2, %v183
    %v185 = vrot.slane %v36, %v184
    %v186 = vlaneseq
    %v187 = vshrl.u32 %v186, 7
    %v188 = vsub.s32 3, %v187
    %v189 = vrot.slane %v36, %v188
    %v190 = vlaneseq
    %v191 = vshrl.u32 %v190, 7
    %v192 = vsub.s32 4, %v191
    %v193 = vrot.slane %v36, %v192
    %v194 = vlaneseq
    %v195 = vshrl.u32 %v194, 7
    %v196 = vsub.s32 5, %v195
    %v197 = vrot.slane %v36, %v196
    %v198 = vlaneseq
    %v199 = vshrl.u32 %v198, 7
    %v200 = vsub.s32 6, %v199
    %v201 = vrot.slane %v36, %v200
    %v202 = vlaneseq
    %v203 = vshrl.u32 %v202, 7
    %v204 = vsub.s32 7, %v203
    %v205 = vrot.slane %v36, %v204
    %v206 = vlaneseq
    %v207 = vshrl.u32 %v206, 7
    %v208 = vsub.s32 0, %v207
    %v209 = vrot.slane %v37, %v208
    %v210 = vlaneseq
    %v211 = vshrl.u32 %v210, 7
    %v212 = vsub.s32 1, %v211
    %v213 = vrot.slane %v37, %v212
    %v214 = vlaneseq
    %v215 = vshrl.u32 %v214, 7
    %v216 = vsub.s32 2, %v215
    %v217 = vrot.slane %v37, %v216
    %v218 = vlaneseq
    %v219 = vshrl.u32 %v218, 7
    %v220 = vsub.s32 3, %v219
    %v221 = vrot.slane %v37, %v220
    %v222 = vlaneseq
    %v223 = vshrl.u32 %v222, 7
    %v224 = vsub.s32 4, %v223
    %v225 = vrot.slane %v37, %v224
    %v226 = vlaneseq
    %v227 = vshrl.u32 %v226, 7
    %v228 = vsub.s32 5, %v227
    %v229 = vrot.slane %v37, %v228
    %v230 = vlaneseq
    %v231 = vshrl.u32 %v230, 7
    %v232 = vsub.s32 6, %v231
    %v233 = vrot.slane %v37, %v232
    %v234 = vlaneseq
    %v235 = vshrl.u32 %v234, 7
    %v236 = vsub.s32 7, %v235
    %v237 = vrot.slane %v37, %v236
    %v238 = vlaneseq
    %v239 = vshrl.u32 %v238, 7
    %v240 = vsub.s32 0, %v239
    %v241 = vrot.slane %v38, %v240
    %v242 = vlaneseq
    %v243 = vshrl.u32 %v242, 7
    %v244 = vsub.s32 1, %v243
    %v245 = vrot.slane %v38, %v244
    %v246 = vlaneseq
    %v247 = vshrl.u32 %v246, 7
    %v248 = vsub.s32 2, %v247
    %v249 = vrot.slane %v38, %v248
    %v250 = vlaneseq
    %v251 = vshrl.u32 %v250, 7
    %v252 = vsub.s32 3, %v251
    %v253 = vrot.slane %v38, %v252
    %v254 = vlaneseq
    %v255 = vshrl.u32 %v254, 7
    %v256 = vsub.s32 4, %v255
    %v257 = vrot.slane %v38, %v256
    %v258 = vlaneseq
    %v259 = vshrl.u32 %v258, 7
    %v260 = vsub.s32 5, %v259
    %v261 = vrot.slane %v38, %v260
    %v262 = vlaneseq
    %v263 = vshrl.u32 %v262, 7
    %v264 = vsub.s32 6, %v263
    %v265 = vrot.slane %v38, %v264
    %v266 = vlaneseq
    %v267 = vshrl.u32 %v266, 7
    %v268 = vsub.s32 7, %v267
    %v269 = vrot.slane %v38, %v268
    %v300 = vcombine.high %v42, %v42
    %v302 = vunpack.c.l.s4 1983009808
    %v303 = vunpack.c.0.s8 %v302
    %v304 = vlaneseq
    %v305 = vshrl.u32 %v304, 7
    %v306 = vsub.s32 %v303, %v305
    %v307 = vrot.slane %v42, %v306
    %v309 = vunpack.c.l.s4 1983009808
    %v310 = vunpack.c.0.s8 %v309
    %v311 = vlaneseq
    %v312 = vshrl.u32 %v311, 7
    %v313 = vsub.s32 %v310, %v312
    %v314 = vrot.slane %v300, %v313
    %v315 = vcombine.high %v307, %v307
    %v316 = vcombine.high %v314, %v314
    %v317 = vcombine.high %v43, %v43
    %v319 = vunpack.c.l.s4 1983009808
    %v320 = vunpack.c.0.s8 %v319
    %v321 = vlaneseq
    %v322 = vshrl.u32 %v321, 7
    %v323 = vsub.s32 %v320, %v322
    %v324 = vrot.slane %v43, %v323
    %v326 = vunpack.c.l.s4 1983009808
    %v327 = vunpack.c.0.s8 %v326
    %v328 = vlaneseq
    %v329 = vshrl.u32 %v328, 7
    %v330 = vsub.s32 %v327, %v329
    %v331 = vrot.slane %v317, %v330
    %v332 = vcombine.high %v324, %v324
    %v333 = vcombine.high %v331, %v331
    %v334 = vcombine.high %v44, %v44
    %v336 = vunpack.c.l.s4 1983009808
    %v337 = vunpack.c.0.s8 %v336
    %v338 = vlaneseq
    %v339 = vshrl.u32 %v338, 7
    %v340 = vsub.s32 %v337, %v339
    %v341 = vrot.slane %v44, %v340
    %v343 = vunpack.c.l.s4 1983009808
    %v344 = vunpack.c.0.s8 %v343
    %v345 = vlaneseq
    %v346 = vshrl.u32 %v345, 7
    %v347 = vsub.s32 %v344, %v346
    %v348 = vrot.slane %v334, %v347
    %v349 = vcombine.high %v341, %v341
    %v350 = vcombine.high %v348, %v348
    %v351 = vcombine.high %v45, %v45
    %v353 = vunpack.c.l.s4 1983009808
    %v354 = vunpack.c.0.s8 %v353
    %v355 = vlaneseq
    %v356 = vshrl.u32 %v355, 7
    %v357 = vsub.s32 %v354, %v356
    %v358 = vrot.slane %v45, %v357
    %v360 = vunpack.c.l.s4 1983009808
    %v361 = vunpack.c.0.s8 %v360
    %v362 = vlaneseq
    %v363 = vshrl.u32 %v362, 7
    %v364 = vsub.s32 %v361, %v363
    %v365 = vrot.slane %v351, %v364
    %v366 = vcombine.high %v358, %v358
    %v367 = vcombine.high %v365, %v365
    %v368 = vcombine.high %v46, %v46
    %v370 = vunpack.c.l.s4 1983009808
    %v371 = vunpack.c.0.s8 %v370
    %v372 = vlaneseq
    %v373 = vshrl.u32 %v372, 7
    %v374 = vsub.s32 %v371, %v373
    %v375 = vrot.slane %v46, %v374
    %v377 = vunpack.c.l.s4 1983009808
    %v378 = vunpack.c.0.s8 %v377
    %v379 = vlaneseq
    %v380 = vshrl.u32 %v379, 7
    %v381 = vsub.s32 %v378, %v380
    %v382 = vrot.slane %v368, %v381
    %v383 = vcombine.high %v375, %v375
    %v384 = vcombine.high %v382, %v382
    %v385 = vcombine.high %v47, %v47
    %v387 = vunpack.c.l.s4 1983009808
    %v388 = vunpack.c.0.s8 %v387
    %v389 = vlaneseq
    %v390 = vshrl.u32 %v389, 7
    %v391 = vsub.s32 %v388, %v390
    %v392 = vrot.slane %v47, %v391
    %v394 = vunpack.c.l.s4 1983009808
    %v395 = vunpack.c.0.s8 %v394
    %v396 = vlaneseq
    %v397 = vshrl.u32 %v396, 7
    %v398 = vsub.s32 %v395, %v397
    %v399 = vrot.slane %v385, %v398
    %v400 = vcombine.high %v392, %v392
    %v401 = vcombine.high %v399, %v399
    %v426 = vsel %vm147, %v177, %v307
    %v427 = vsel %vm148, %v181, %v315
    %v428 = vsel %vm149, %v185, %v314
    %v429 = vsel %vm150, %v189, %v316
    %v430 = vsel %vm151, %v193, %v324
    %v431 = vsel %vm152, %v197, %v332
    %v432 = vsel %vm153, %v201, %v331
    %v433 = vsel %vm154, %v205, %v333
    %v434 = vsel %vm155, %v209, %v341
    %v435 = vsel %vm156, %v213, %v349
    %v436 = vsel %vm157, %v217, %v348
    %v437 = vsel %vm158, %v221, %v350
    %v438 = vsel %vm159, %v225, %v358
    %v439 = vsel %vm160, %v229, %v366
    %v440 = vsel %vm161, %v233, %v365
    %v441 = vsel %vm162, %v237, %v367
    %v442 = vsel %vm163, %v241, %v375
    %v443 = vsel %vm164, %v245, %v383
    %v444 = vsel %vm165, %v249, %v382
    %v445 = vsel %vm166, %v253, %v384
    %v446 = vsel %vm167, %v257, %v392
    %v447 = vsel %vm168, %v261, %v400
    %v448 = vsel %vm169, %v265, %v399
    %v449 = vsel %vm170, %v269, %v401
    %v474 = vcombine.low %v426, %v427
    %v475 = vcombine.low %v428, %v429
    %v477 = vunpack.c.l.s4 1983009808
    %v478 = vunpack.c.0.s8 %v477
    %v479 = vlaneseq
    %v480 = vshrl.u32 %v479, 7
    %v481 = vsub.s32 %v478, %v480
    %v482 = vrot.slane %v474, %v481
    %v484 = vunpack.c.l.s4 1983009808
    %v485 = vunpack.c.0.s8 %v484
    %v486 = vlaneseq
    %v487 = vshrl.u32 %v486, 7
    %v488 = vsub.s32 %v485, %v487
    %v489 = vrot.slane %v475, %v488
    %v490 = vcombine.low %v482, %v489
    %v491 = vcombine.low %v430, %v431
    %v492 = vcombine.low %v432, %v433
    %v494 = vunpack.c.l.s4 1983009808
    %v495 = vunpack.c.0.s8 %v494
    %v496 = vlaneseq
    %v497 = vshrl.u32 %v496, 7
    %v498 = vsub.s32 %v495, %v497
    %v499 = vrot.slane %v491, %v498
    %v501 = vunpack.c.l.s4 1983009808
    %v502 = vunpack.c.0.s8 %v501
    %v503 = vlaneseq
    %v504 = vshrl.u32 %v503, 7
    %v505 = vsub.s32 %v502, %v504
    %v506 = vrot.slane %v492, %v505
    %v507 = vcombine.low %v499, %v506
    %v508 = vcombine.low %v434, %v435
    %v509 = vcombine.low %v436, %v437
    %v511 = vunpack.c.l.s4 1983009808
    %v512 = vunpack.c.0.s8 %v511
    %v513 = vlaneseq
    %v514 = vshrl.u32 %v513, 7
    %v515 = vsub.s32 %v512, %v514
    %v516 = vrot.slane %v508, %v515
    %v518 = vunpack.c.l.s4 1983009808
    %v519 = vunpack.c.0.s8 %v518
    %v520 = vlaneseq
    %v521 = vshrl.u32 %v520, 7
    %v522 = vsub.s32 %v519, %v521
    %v523 = vrot.slane %v509, %v522
    %v524 = vcombine.low %v516, %v523
    %v525 = vcombine.low %v438, %v439
    %v526 = vcombine.low %v440, %v441
    %v528 = vunpack.c.l.s4 1983009808
    %v529 = vunpack.c.0.s8 %v528
    %v530 = vlaneseq
    %v531 = vshrl.u32 %v530, 7
    %v532 = vsub.s32 %v529, %v531
    %v533 = vrot.slane %v525, %v532
    %v535 = vunpack.c.l.s4 1983009808
    %v536 = vunpack.c.0.s8 %v535
    %v537 = vlaneseq
    %v538 = vshrl.u32 %v537, 7
    %v539 = vsub.s32 %v536, %v538
    %v540 = vrot.slane %v526, %v539
    %v541 = vcombine.low %v533, %v540
    %v542 = vcombine.low %v442, %v443
    %v543 = vcombine.low %v444, %v445
    %v545 = vunpack.c.l.s4 1983009808
    %v546 = vunpack.c.0.s8 %v545
    %v547 = vlaneseq
    %v548 = vshrl.u32 %v547, 7
    %v549 = vsub.s32 %v546, %v548
    %v550 = vrot.slane %v542, %v549
    %v552 = vunpack.c.l.s4 1983009808
    %v553 = vunpack.c.0.s8 %v552
    %v554 = vlaneseq
    %v555 = vshrl.u32 %v554, 7
    %v556 = vsub.s32 %v553, %v555
    %v557 = vrot.slane %v543, %v556
    %v558 = vcombine.low %v550, %v557
    %v559 = vcombine.low %v446, %v447
    %v560 = vcombine.low %v448, %v449
    %v562 = vunpack.c.l.s4 1983009808
    %v563 = vunpack.c.0.s8 %v562
    %v564 = vlaneseq
    %v565 = vshrl.u32 %v564, 7
    %v566 = vsub.s32 %v563, %v565
    %v567 = vrot.slane %v559, %v566
    %v569 = vunpack.c.l.s4 1983009808
    %v570 = vunpack.c.0.s8 %v569
    %v571 = vlaneseq
    %v572 = vshrl.u32 %v571, 7
    %v573 = vsub.s32 %v570, %v572
    %v574 = vrot.slane %v560, %v573
    %v575 = vcombine.low %v567, %v574
    %582 = vst [vmem:[#allocation7] sm:$0xff] %v490
    %583 = vst [vmem:[#allocation7 + $0x8] sm:$0xff] %v507
    %584 = vst [vmem:[#allocation7 + $0x10] sm:$0xff] %v524
    %585 = vst [vmem:[#allocation7 + $0x18] sm:$0xff] %v541
    %586 = vst [vmem:[#allocation7 + $0x20] sm:$0xff] %v558
    %587 = vst [vmem:[#allocation7 + $0x28] sm:$0xff] %v575
    // Predicated region
    $region18: #{tpu_custom_call.1} parent=1 // pred_check
      _
    $region19: #{tpu_custom_call.1} parent=1 // pred_check_branch
      %589 = sbr.rel (0) target = $region21
    $region20: #{tpu_custom_call.1} parent=1 // pred_region
      %s591 = ssub.s32 768, 768
      %592 = vsyncadd [#allocation4], %s591
      %s594 = sshll.u32 [#allocation7], 4
      %s595 = int_to_ptr.vmem [resolvable:$true] %s594
      %597 = dma.vmem_to_hbm [thread:$0]  %s595, 768, %s2, [#allocation4]
    $region21: #{tpu_custom_call.1} parent=1 // pred_fallthru
      _
    // Predicated region
    $region22: #{tpu_custom_call.1} parent=1 // pred_check
      _
    $region23: #{tpu_custom_call.1} parent=1 // pred_check_branch
      %599 = sbr.rel (0) target = $region25
    $region24: #{tpu_custom_call.1} parent=1 // pred_region
      %600 = dma.done [#allocation4], 768
    $region25: #{tpu_custom_call.1} parent=1 // pred_fallthru
      _
    %601 = vsyncpa [#allocation3], 1
    %602 = vsyncpa [#allocation6], 1
    %603 = vsyncpa [#allocation4], 1

</llo_original>
